<compile_context>
chip_gen: v5e
topology: v5e:2x2
jax: 0.10.0
libtpu: 0.0.40
codegen_flags: <defaults>
</compile_context>

<pallas_src>
import functools

import jax
import jax.numpy as jnp
from jax.experimental import pallas as pl
from jax.experimental.pallas import tpu as pltpu


# ----------------------------- glue (plain JAX) -----------------------------

def _round_up(a, m):
    return ((a + m - 1) // m) * m


def pad_seqs_frames(seqs, frame_padding):
    """[B, T, x_dim] -> [B, T, x_dim*(1+2*fp)] by splicing neighbouring frames."""
    # TODO(synk): reference pad_seqs_frames source not given; zero-pad the time
    # axis at sequence boundaries (common frame-splicing convention).
    B, T, D = seqs.shape
    padded = jnp.pad(seqs, ((0, 0), (frame_padding, frame_padding), (0, 0)))
    frames = [padded[:, i:i + T, :] for i in range(2 * frame_padding + 1)]
    return jnp.concatenate(frames, axis=-1)


def unpad_seqs_frames(seqs, frame_padding, x_dim):
    """Take back the centre frame: [B, T, padded_x_dim] -> [B, T, x_dim]."""
    return seqs[..., frame_padding * x_dim:(frame_padding + 1) * x_dim]


def make_ffn_params(key, dims):
    """Deterministic Linear-layer params: W[i]: [dims[i], dims[i+1]], b: [1, dims[i+1]]."""
    params = []
    for din, dout in zip(dims[:-1], dims[1:]):
        key, kw, kb = jax.random.split(key, 3)
        w = jax.random.normal(kw, (din, dout), jnp.float32) / jnp.sqrt(jnp.float32(din))
        b = 0.01 * jax.random.normal(kb, (1, dout), jnp.float32)
        params += [w, b]
    return params


# ------------------------------ Pallas kernel -------------------------------

def vqvae_kernel(num_embeddings, embedding_dim, tile_n, n_valid, slab_pad,
                 x_ref, spk_ref,
                 w1_ref, b1_ref, w2_ref, b2_ref, w3_ref, b3_ref,
                 et_ref, esq_ref, ecat_ref,
                 bd1_ref, wd2_ref, bd2_ref, wd3_ref, bd3_ref,
                 slab_ref, loss_ref):
    f32, bf16 = jnp.float32, jnp.bfloat16
    D = embedding_dim
    K = num_embeddings

    # ---- encoder FeedForward (ReLU; dropout / batch_norm are inference no-ops) ----
    # TODO(synk): FeedForward's dropout_p / batch_norm branches are identity at
    # inference; they are not modelled here.
    h = jnp.dot(x_ref[...], w1_ref[...], preferred_element_type=f32) + b1_ref[...]
    h = jnp.maximum(h, 0.0)
    h = jnp.dot(h.astype(bf16), w2_ref[...], preferred_element_type=f32) + b2_ref[...]
    h = jnp.maximum(h, 0.0)
    z = jnp.dot(h.astype(bf16), w3_ref[...], preferred_element_type=f32) + b3_ref[...]   # [tn, D]

    # ---- vector quantizer: nearest codebook entry (bf16 operands, f32 acc) ----
    z_sq = jnp.sum(z * z, axis=1, keepdims=True)                                          # [tn, 1]
    z_e = jnp.dot(z.astype(bf16), et_ref[...], preferred_element_type=f32)                # [tn, K]
    dists = z_sq - 2.0 * z_e + esq_ref[...]                                               # [tn, K]
    iota_k = jax.lax.broadcasted_iota(jnp.int32, dists.shape, 1)
    d_min = jnp.min(dists, axis=1, keepdims=True)
    idx = jnp.min(jnp.where(dists <= d_min, iota_k, K),
                  axis=1, keepdims=True)                               # first argmin, [tn, 1]
    onehot = (iota_k == idx).astype(bf16)                              # exact 0/1, [tn, K]

    # ---- fused codebook gather + decoder layer-1 + speaker bias (single MXU pass) ----
    #   [onehot_K | onehot_spk] @ [[E | E@Wd1q], [0 | Wd1s]]
    lhs = jnp.concatenate([onehot, spk_ref[...]], axis=1)              # [tn, K+S]
    r = jnp.dot(lhs, ecat_ref[...], preferred_element_type=f32)        # [tn, D + H1]
    q = r[:, :D]                                                       # gathered codebook rows
    h1 = jnp.maximum(r[:, D:] + bd1_ref[...], 0.0)

    # ---- VQ loss: per-tile partial SSE in f32, padded rows masked out ----
    row = pl.program_id(0) * tile_n + jax.lax.broadcasted_iota(jnp.int32, (tile_n, 1), 0)
    valid = (row < n_valid).astype(f32)                                # [tn, 1]
    diff = q - z
    d2 = diff * diff * valid
    sse = jnp.sum(jnp.sum(d2, axis=1, keepdims=True), axis=0, keepdims=True)   # [1, 1]
    loss_ref[...] = jnp.broadcast_to(sse, loss_ref.shape)

    # ---- decoder hidden / output layers ----
    h2 = jnp.maximum(jnp.dot(h1.astype(bf16), wd2_ref[...], preferred_element_type=f32)
                     + bd2_ref[...], 0.0)
    pred = (jnp.dot(h2.astype(bf16), wd3_ref[...], preferred_element_type=f32)
            + bd3_ref[...])                                            # [tn, P]

    # ---- pack one lane-dense bf16 output slab: [pred | q | enc | idx | zero-pad] ----
    pieces = [pred.astype(bf16), q.astype(bf16), z.astype(bf16),
              idx.astype(f32).astype(bf16)]                            # idx exact in bf16 (K < 256)
    if slab_pad > 0:
        pieces.append(jnp.zeros((tile_n, slab_pad), bf16))
    slab_ref[...] = jnp.concatenate(pieces, axis=-1)


# ------------------------------ wrapper --------------------------------------

def vqvae_forward(seqs, speaker_onehot, enc_params, embeddings, dec_params,
                  x_dim, frame_padding, commitment_cost, tile_n=4096):
    B, T, _ = seqs.shape
    padded = pad_seqs_frames(seqs, frame_padding)                      # [B, T, P]
    N = B * T
    P = padded.shape[-1]

    w1, b1, w2, b2, w3, b3 = enc_params
    wd1, bd1, wd2, bd2, wd3, bd3 = dec_params
    K, D = embeddings.shape
    S = speaker_onehot.shape[-1]
    H1 = wd1.shape[1]

    # ---- one-time precompute, hoisted out of the kernel steady state ----
    wd1q, wd1s = wd1[:D, :], wd1[D:, :]
    emb_t = embeddings.T                                               # [D, K]
    e_sq = jnp.sum(embeddings * embeddings, axis=1)[None, :]           # [1, K]
    # fused gather / decoder-layer-1 / speaker table: [[E | E@Wd1q], [0 | Wd1s]]
    e_cat = jnp.concatenate(
        [jnp.concatenate([embeddings, embeddings @ wd1q], axis=1),
         jnp.concatenate([jnp.zeros((S, D), jnp.float32), wd1s], axis=1)],
        axis=0)                                                        # [K+S, D+H1]

    # ---- row tiling: big tiles (mult. of 16), but keep >= 2 grid steps when
    #      possible so v7x megacore can shard the parallel axis across cores ----
    tile_n = int(tile_n)
    tile_n = min(tile_n, _round_up(max((N + 1) // 2, 1), 16))
    tile_n = max(16, min(tile_n, _round_up(N, 16)))
    num_tiles = -(-N // tile_n)
    n_pad = num_tiles * tile_n

    def pad_rows(a):
        return jnp.pad(a, ((0, n_pad - a.shape[0]), (0, 0)))

    x2d = pad_rows(padded.reshape(N, P)).astype(jnp.bfloat16)
    spk2d = pad_rows(speaker_onehot.reshape(N, S).astype(jnp.float32)).astype(jnp.bfloat16)

    slab_w = _round_up(P + 2 * D + 1, 128)
    slab_pad = slab_w - (P + 2 * D + 1)

    bf = lambda a: a.astype(jnp.bfloat16)
    row_spec = lambda feat: pl.BlockSpec((tile_n, feat), lambda i: (i, 0))
    full_spec = lambda a: pl.BlockSpec(a.shape, lambda i: (0, 0))

    kernel = functools.partial(vqvae_kernel, int(K), int(D), int(tile_n), int(N),
                               int(slab_pad))

    grid_spec = pltpu.PrefetchScalarGridSpec(
        num_scalar_prefetch=0,
        grid=(num_tiles,),
        in_specs=[
            row_spec(P),                       # x rows (frame-padded), bf16
            row_spec(S),                       # speaker one-hot rows, bf16 (exact)
            full_spec(w1), full_spec(b1),
            full_spec(w2), full_spec(b2),
            full_spec(w3), full_spec(b3),
            full_spec(emb_t), full_spec(e_sq), full_spec(e_cat),
            full_spec(bd1), full_spec(wd2), full_spec(bd2),
            full_spec(wd3), full_spec(bd3),
        ],
        out_specs=(
            pl.BlockSpec((tile_n, slab_w), lambda i: (i, 0)),   # packed per-row slab (bf16)
            pl.BlockSpec((8, 128), lambda i: (i, 0)),           # per-tile partial SSE (f32)
        ),
    )

    slab, loss_part = pl.pallas_call(
        kernel,
        out_shape=(jax.ShapeDtypeStruct((n_pad, slab_w), jnp.bfloat16),
                   jax.ShapeDtypeStruct((8 * num_tiles, 128), jnp.float32)),
        grid_spec=grid_spec,
        compiler_params=pltpu.CompilerParams(
            dimension_semantics=("parallel",),
            vmem_limit_bytes=32 * 1024 * 1024),
    )(x2d, spk2d,
      bf(w1), b1, bf(w2), b2, bf(w3), b3,
      bf(emb_t), e_sq, bf(e_cat),
      bd1, bf(wd2), bd2, bf(wd3), bd3)

    # ---- unpack the lane-dense slab ----
    pred2d = slab[:N, :P].astype(jnp.float32)
    q2d = slab[:N, P:P + D].astype(jnp.float32)
    enc2d = slab[:N, P + D:P + 2 * D].astype(jnp.float32)
    idx = slab[:N, P + 2 * D].astype(jnp.int32)   # exact small integers in bf16

    sse = jnp.sum(loss_part[0::8, 0])             # one f32 partial per tile
    mse = sse / jnp.float32(N * D)
    # q_latent_loss + commitment_cost * e_latent_loss (identical forward values)
    vq_loss = (1.0 + commitment_cost) * mse

    seqs_pred = unpad_seqs_frames(pred2d.reshape(B, T, P), frame_padding, x_dim)
    return (seqs_pred, vq_loss,
            q2d.reshape(B, T, D), idx.reshape(B, T), enc2d.reshape(B, T, D))


# -------------------------------- main ---------------------------------------

if __name__ == "__main__":
    key = jax.random.PRNGKey(0)
    B, T = 2, 8
    x_dim = 16
    frame_padding = 1
    hidden_dims = [32, 32]
    embedding_dim = 16
    num_embeddings = 32
    commitment_cost = 0.25
    nb_speakers = 4
    padded_x_dim = x_dim * (1 + 2 * frame_padding)

    k_seq, k_spk, k_enc, k_dec, k_emb = jax.random.split(key, 5)
    seqs = jax.random.normal(k_seq, (B, T, x_dim), jnp.float32)
    spk_ids = jax.random.randint(k_spk, (B,), 0, nb_speakers)
    speaker_onehot = jax.nn.one_hot(spk_ids, nb_speakers, dtype=jnp.float32)
    speaker_onehot = jnp.broadcast_to(speaker_onehot[:, None, :], (B, T, nb_speakers))

    enc_dims = [padded_x_dim] + hidden_dims + [embedding_dim]
    dec_dims = [embedding_dim + nb_speakers] + hidden_dims + [padded_x_dim]
    enc_params = make_ffn_params(k_enc, enc_dims)
    dec_params = make_ffn_params(k_dec, dec_dims)
    embeddings = jax.random.uniform(
        k_emb, (num_embeddings, embedding_dim), jnp.float32,
        -1.0 / num_embeddings, 1.0 / num_embeddings)

    outs = vqvae_forward(seqs, speaker_onehot, enc_params, embeddings, dec_params,
                         x_dim, frame_padding, commitment_cost)
    outs = jax.block_until_ready(outs)
    seqs_pred, vq_loss, quantized, q_index, enc_out = outs
    assert seqs_pred.shape == (B, T, x_dim)
    assert quantized.shape == (B, T, embedding_dim)
    assert q_index.shape == (B, T)
    assert enc_out.shape == (B, T, embedding_dim)
    assert vq_loss.shape == ()
    print("KERNEL_OK")
</pallas_src>

<mosaic_0001>
module attributes {stable_mosaic.version = 11 : i64} {
  func.func @vqvae_kernel(%arg0: i32, %arg1: memref<16x48xbf16, #tpu.memory_space<vmem>>, %arg2: memref<16x4xbf16, #tpu.memory_space<vmem>>, %arg3: memref<48x32xbf16, #tpu.memory_space<vmem>>, %arg4: memref<1x32xf32, #tpu.memory_space<vmem>>, %arg5: memref<32x32xbf16, #tpu.memory_space<vmem>>, %arg6: memref<1x32xf32, #tpu.memory_space<vmem>>, %arg7: memref<32x16xbf16, #tpu.memory_space<vmem>>, %arg8: memref<1x16xf32, #tpu.memory_space<vmem>>, %arg9: memref<16x32xbf16, #tpu.memory_space<vmem>>, %arg10: memref<1x32xf32, #tpu.memory_space<vmem>>, %arg11: memref<36x48xbf16, #tpu.memory_space<vmem>>, %arg12: memref<1x32xf32, #tpu.memory_space<vmem>>, %arg13: memref<32x32xbf16, #tpu.memory_space<vmem>>, %arg14: memref<1x32xf32, #tpu.memory_space<vmem>>, %arg15: memref<32x48xbf16, #tpu.memory_space<vmem>>, %arg16: memref<1x48xf32, #tpu.memory_space<vmem>>, %arg17: memref<16x128xbf16, #tpu.memory_space<vmem>>, %arg18: memref<8x128xf32, #tpu.memory_space<vmem>>) attributes {dimension_semantics = [#tpu.dimension_semantics<parallel>], iteration_bounds = array<i64: 1>, scalar_prefetch = 0 : i64, scratch_operands = 0 : i64, tpu.core_type = #tpu.core_type<tc>, window_params = [{transform_indices = @transform_0, window_bounds = array<i64: 16, 48>}, {transform_indices = @transform_1, window_bounds = array<i64: 16, 4>}, {pipeline_mode = #tpu.pipeline_mode<synchronous>, transform_indices = @transform_2, window_bounds = array<i64: 48, 32>}, {pipeline_mode = #tpu.pipeline_mode<synchronous>, transform_indices = @transform_3, window_bounds = array<i64: 1, 32>}, {pipeline_mode = #tpu.pipeline_mode<synchronous>, transform_indices = @transform_4, window_bounds = array<i64: 32, 32>}, {pipeline_mode = #tpu.pipeline_mode<synchronous>, transform_indices = @transform_5, window_bounds = array<i64: 1, 32>}, {pipeline_mode = #tpu.pipeline_mode<synchronous>, transform_indices = @transform_6, window_bounds = array<i64: 32, 16>}, {pipeline_mode = #tpu.pipeline_mode<synchronous>, transform_indices = @transform_7, window_bounds = array<i64: 1, 16>}, {pipeline_mode = #tpu.pipeline_mode<synchronous>, transform_indices = @transform_8, window_bounds = array<i64: 16, 32>}, {pipeline_mode = #tpu.pipeline_mode<synchronous>, transform_indices = @transform_9, window_bounds = array<i64: 1, 32>}, {pipeline_mode = #tpu.pipeline_mode<synchronous>, transform_indices = @transform_10, window_bounds = array<i64: 36, 48>}, {pipeline_mode = #tpu.pipeline_mode<synchronous>, transform_indices = @transform_11, window_bounds = array<i64: 1, 32>}, {pipeline_mode = #tpu.pipeline_mode<synchronous>, transform_indices = @transform_12, window_bounds = array<i64: 32, 32>}, {pipeline_mode = #tpu.pipeline_mode<synchronous>, transform_indices = @transform_13, window_bounds = array<i64: 1, 32>}, {pipeline_mode = #tpu.pipeline_mode<synchronous>, transform_indices = @transform_14, window_bounds = array<i64: 32, 48>}, {pipeline_mode = #tpu.pipeline_mode<synchronous>, transform_indices = @transform_15, window_bounds = array<i64: 1, 48>}, {transform_indices = @transform_16, window_bounds = array<i64: 16, 128>}, {transform_indices = @transform_17, window_bounds = array<i64: 8, 128>}]} {
    %c0 = arith.constant 0 : index
    %c0_0 = arith.constant 0 : index
    %0 = vector.load %arg1[%c0, %c0_0] : memref<16x48xbf16, #tpu.memory_space<vmem>>, vector<16x48xbf16>
    %c0_1 = arith.constant 0 : index
    %c0_2 = arith.constant 0 : index
    %1 = vector.load %arg3[%c0_1, %c0_2] : memref<48x32xbf16, #tpu.memory_space<vmem>>, vector<48x32xbf16>
    %cst = arith.constant dense<0.000000e+00> : vector<16x32xf32>
    %2 = tpu.matmul %0, %1, %cst {dimension_numbers = #tpu.dot_dimension_numbers<[1], [0], [0], [1], [0, 0, 1, 1], [], []>} : vector<16x48xbf16>, vector<48x32xbf16>, vector<16x32xf32> -> vector<16x32xf32>
    %c0_3 = arith.constant 0 : index
    %c0_4 = arith.constant 0 : index
    %3 = vector.load %arg4[%c0_3, %c0_4] : memref<1x32xf32, #tpu.memory_space<vmem>>, vector<1x32xf32>
    %4 = vector.broadcast %3 : vector<1x32xf32> to vector<16x32xf32>
    %5 = arith.addf %2, %4 : vector<16x32xf32>
    %cst_5 = arith.constant 0.000000e+00 : f32
    %6 = vector.broadcast %cst_5 : f32 to vector<16x32xf32>
    %7 = arith.maximumf %5, %6 : vector<16x32xf32>
    %8 = arith.truncf %7 : vector<16x32xf32> to vector<16x32xbf16>
    %c0_6 = arith.constant 0 : index
    %c0_7 = arith.constant 0 : index
    %9 = vector.load %arg5[%c0_6, %c0_7] : memref<32x32xbf16, #tpu.memory_space<vmem>>, vector<32x32xbf16>
    %cst_8 = arith.constant dense<0.000000e+00> : vector<16x32xf32>
    %10 = tpu.matmul %8, %9, %cst_8 {dimension_numbers = #tpu.dot_dimension_numbers<[1], [0], [0], [1], [0, 0, 1, 1], [], []>} : vector<16x32xbf16>, vector<32x32xbf16>, vector<16x32xf32> -> vector<16x32xf32>
    %c0_9 = arith.constant 0 : index
    %c0_10 = arith.constant 0 : index
    %11 = vector.load %arg6[%c0_9, %c0_10] : memref<1x32xf32, #tpu.memory_space<vmem>>, vector<1x32xf32>
    %12 = vector.broadcast %11 : vector<1x32xf32> to vector<16x32xf32>
    %13 = arith.addf %10, %12 : vector<16x32xf32>
    %cst_11 = arith.constant 0.000000e+00 : f32
    %14 = vector.broadcast %cst_11 : f32 to vector<16x32xf32>
    %15 = arith.maximumf %13, %14 : vector<16x32xf32>
    %16 = arith.truncf %15 : vector<16x32xf32> to vector<16x32xbf16>
    %c0_12 = arith.constant 0 : index
    %c0_13 = arith.constant 0 : index
    %17 = vector.load %arg7[%c0_12, %c0_13] : memref<32x16xbf16, #tpu.memory_space<vmem>>, vector<32x16xbf16>
    %cst_14 = arith.constant dense<0.000000e+00> : vector<16x16xf32>
    %18 = tpu.matmul %16, %17, %cst_14 {dimension_numbers = #tpu.dot_dimension_numbers<[1], [0], [0], [1], [0, 0, 1, 1], [], []>} : vector<16x32xbf16>, vector<32x16xbf16>, vector<16x16xf32> -> vector<16x16xf32>
    %c0_15 = arith.constant 0 : index
    %c0_16 = arith.constant 0 : index
    %19 = vector.load %arg8[%c0_15, %c0_16] : memref<1x16xf32, #tpu.memory_space<vmem>>, vector<1x16xf32>
    %20 = vector.broadcast %19 : vector<1x16xf32> to vector<16x16xf32>
    %21 = arith.addf %18, %20 : vector<16x16xf32>
    %22 = arith.mulf %21, %21 : vector<16x16xf32>
    %cst_17 = arith.constant dense<0.000000e+00> : vector<16xf32>
    %23 = vector.multi_reduction <add>, %22, %cst_17 [1] : vector<16x16xf32> to vector<16xf32>
    %24 = vector.shape_cast %23 : vector<16xf32> to vector<16x1xf32>
    %25 = arith.truncf %21 : vector<16x16xf32> to vector<16x16xbf16>
    %c0_18 = arith.constant 0 : index
    %c0_19 = arith.constant 0 : index
    %26 = vector.load %arg9[%c0_18, %c0_19] : memref<16x32xbf16, #tpu.memory_space<vmem>>, vector<16x32xbf16>
    %cst_20 = arith.constant dense<0.000000e+00> : vector<16x32xf32>
    %27 = tpu.matmul %25, %26, %cst_20 {dimension_numbers = #tpu.dot_dimension_numbers<[1], [0], [0], [1], [0, 0, 1, 1], [], []>} : vector<16x16xbf16>, vector<16x32xbf16>, vector<16x32xf32> -> vector<16x32xf32>
    %cst_21 = arith.constant 2.000000e+00 : f32
    %28 = vector.broadcast %cst_21 : f32 to vector<16x32xf32>
    %29 = arith.mulf %28, %27 : vector<16x32xf32>
    %30 = vector.broadcast %24 : vector<16x1xf32> to vector<16x32xf32>
    %31 = arith.subf %30, %29 : vector<16x32xf32>
    %c0_22 = arith.constant 0 : index
    %c0_23 = arith.constant 0 : index
    %32 = vector.load %arg10[%c0_22, %c0_23] : memref<1x32xf32, #tpu.memory_space<vmem>>, vector<1x32xf32>
    %33 = vector.broadcast %32 : vector<1x32xf32> to vector<16x32xf32>
    %34 = arith.addf %31, %33 : vector<16x32xf32>
    %35 = tpu.iota {dimensions = array<i32: 1>} : vector<16x32xi32>
    %cst_24 = arith.constant dense<0x7F800000> : vector<16xf32>
    %36 = vector.multi_reduction <minimumf>, %34, %cst_24 [1] : vector<16x32xf32> to vector<16xf32>
    %37 = vector.shape_cast %36 : vector<16xf32> to vector<16x1xf32>
    %38 = vector.broadcast %37 : vector<16x1xf32> to vector<16x32xf32>
    %39 = arith.cmpf ole, %34, %38 : vector<16x32xf32>
    %c32_i32 = arith.constant 32 : i32
    %40 = vector.broadcast %c32_i32 : i32 to vector<16x32xi32>
    %41 = arith.select %39, %35, %40 : vector<16x32xi1>, vector<16x32xi32>
    %cst_25 = arith.constant dense<2147483647> : vector<16xi32>
    %42 = vector.multi_reduction <minsi>, %41, %cst_25 [1] : vector<16x32xi32> to vector<16xi32>
    %43 = vector.shape_cast %42 : vector<16xi32> to vector<16x1xi32>
    %44 = vector.broadcast %43 : vector<16x1xi32> to vector<16x32xi32>
    %45 = arith.cmpi eq, %35, %44 : vector<16x32xi32>
    %46 = arith.extui %45 : vector<16x32xi1> to vector<16x32xi32>
    %47 = arith.sitofp %46 : vector<16x32xi32> to vector<16x32xf32>
    %48 = arith.truncf %47 : vector<16x32xf32> to vector<16x32xbf16>
    %c0_26 = arith.constant 0 : index
    %c0_27 = arith.constant 0 : index
    %49 = vector.load %arg2[%c0_26, %c0_27] : memref<16x4xbf16, #tpu.memory_space<vmem>>, vector<16x4xbf16>
    %50 = tpu.concatenate %48, %49 in 1 : vector<16x32xbf16>, vector<16x4xbf16> -> vector<16x36xbf16>
    %c0_28 = arith.constant 0 : index
    %c0_29 = arith.constant 0 : index
    %51 = vector.load %arg11[%c0_28, %c0_29] : memref<36x48xbf16, #tpu.memory_space<vmem>>, vector<36x48xbf16>
    %cst_30 = arith.constant dense<0.000000e+00> : vector<16x48xf32>
    %52 = tpu.matmul %50, %51, %cst_30 {dimension_numbers = #tpu.dot_dimension_numbers<[1], [0], [0], [1], [0, 0, 1, 1], [], []>} : vector<16x36xbf16>, vector<36x48xbf16>, vector<16x48xf32> -> vector<16x48xf32>
    %53 = vector.extract_strided_slice %52 {offsets = [0, 0], sizes = [16, 16], strides = [1, 1]} : vector<16x48xf32> to vector<16x16xf32>
    %54 = vector.extract_strided_slice %52 {offsets = [0, 16], sizes = [16, 32], strides = [1, 1]} : vector<16x48xf32> to vector<16x32xf32>
    %c0_31 = arith.constant 0 : index
    %c0_32 = arith.constant 0 : index
    %55 = vector.load %arg12[%c0_31, %c0_32] : memref<1x32xf32, #tpu.memory_space<vmem>>, vector<1x32xf32>
    %56 = vector.broadcast %55 : vector<1x32xf32> to vector<16x32xf32>
    %57 = arith.addf %54, %56 : vector<16x32xf32>
    %cst_33 = arith.constant 0.000000e+00 : f32
    %58 = vector.broadcast %cst_33 : f32 to vector<16x32xf32>
    %59 = arith.maximumf %57, %58 : vector<16x32xf32>
    %c16_i32 = arith.constant 16 : i32
    %60 = arith.muli %arg0, %c16_i32 : i32
    %61 = tpu.iota {dimensions = array<i32: 0>} : vector<16x1xi32>
    %62 = vector.broadcast %60 : i32 to vector<16x1xi32>
    %63 = arith.addi %62, %61 : vector<16x1xi32>
    %c16_i32_34 = arith.constant 16 : i32
    %64 = vector.broadcast %c16_i32_34 : i32 to vector<16x1xi32>
    %65 = arith.cmpi slt, %63, %64 : vector<16x1xi32>
    %66 = arith.extui %65 : vector<16x1xi1> to vector<16x1xi32>
    %67 = arith.sitofp %66 : vector<16x1xi32> to vector<16x1xf32>
    %68 = arith.subf %53, %21 : vector<16x16xf32>
    %69 = arith.mulf %68, %68 : vector<16x16xf32>
    %70 = vector.broadcast %67 : vector<16x1xf32> to vector<16x16xf32>
    %71 = arith.mulf %69, %70 : vector<16x16xf32>
    %cst_35 = arith.constant dense<0.000000e+00> : vector<16xf32>
    %72 = vector.multi_reduction <add>, %71, %cst_35 [1] : vector<16x16xf32> to vector<16xf32>
    %73 = vector.shape_cast %72 : vector<16xf32> to vector<16x1xf32>
    %cst_36 = arith.constant dense<0.000000e+00> : vector<1xf32>
    %74 = vector.multi_reduction <add>, %73, %cst_36 [0] : vector<16x1xf32> to vector<1xf32>
    %75 = vector.shape_cast %74 : vector<1xf32> to vector<1x1xf32>
    %76 = vector.shape_cast %75 : vector<1x1xf32> to vector<1x1xf32>
    %77 = vector.broadcast %76 : vector<1x1xf32> to vector<8x128xf32>
    %c0_37 = arith.constant 0 : index
    %c0_38 = arith.constant 0 : index
    %78 = vector.load %arg18[%c0_37, %c0_38] : memref<8x128xf32, #tpu.memory_space<vmem>>, vector<8x128xf32>
    tpu.vector_store %arg18[%c0_37, %c0_38], %77 {strides = array<i32>} : memref<8x128xf32, #tpu.memory_space<vmem>>, vector<8x128xf32>,
    %79 = arith.truncf %59 : vector<16x32xf32> to vector<16x32xbf16>
    %c0_39 = arith.constant 0 : index
    %c0_40 = arith.constant 0 : index
    %80 = vector.load %arg13[%c0_39, %c0_40] : memref<32x32xbf16, #tpu.memory_space<vmem>>, vector<32x32xbf16>
    %cst_41 = arith.constant dense<0.000000e+00> : vector<16x32xf32>
    %81 = tpu.matmul %79, %80, %cst_41 {dimension_numbers = #tpu.dot_dimension_numbers<[1], [0], [0], [1], [0, 0, 1, 1], [], []>} : vector<16x32xbf16>, vector<32x32xbf16>, vector<16x32xf32> -> vector<16x32xf32>
    %c0_42 = arith.constant 0 : index
    %c0_43 = arith.constant 0 : index
    %82 = vector.load %arg14[%c0_42, %c0_43] : memref<1x32xf32, #tpu.memory_space<vmem>>, vector<1x32xf32>
    %83 = vector.broadcast %82 : vector<1x32xf32> to vector<16x32xf32>
    %84 = arith.addf %81, %83 : vector<16x32xf32>
    %cst_44 = arith.constant 0.000000e+00 : f32
    %85 = vector.broadcast %cst_44 : f32 to vector<16x32xf32>
    %86 = arith.maximumf %84, %85 : vector<16x32xf32>
    %87 = arith.truncf %86 : vector<16x32xf32> to vector<16x32xbf16>
    %c0_45 = arith.constant 0 : index
    %c0_46 = arith.constant 0 : index
    %88 = vector.load %arg15[%c0_45, %c0_46] : memref<32x48xbf16, #tpu.memory_space<vmem>>, vector<32x48xbf16>
    %cst_47 = arith.constant dense<0.000000e+00> : vector<16x48xf32>
    %89 = tpu.matmul %87, %88, %cst_47 {dimension_numbers = #tpu.dot_dimension_numbers<[1], [0], [0], [1], [0, 0, 1, 1], [], []>} : vector<16x32xbf16>, vector<32x48xbf16>, vector<16x48xf32> -> vector<16x48xf32>
    %c0_48 = arith.constant 0 : index
    %c0_49 = arith.constant 0 : index
    %90 = vector.load %arg16[%c0_48, %c0_49] : memref<1x48xf32, #tpu.memory_space<vmem>>, vector<1x48xf32>
    %91 = vector.broadcast %90 : vector<1x48xf32> to vector<16x48xf32>
    %92 = arith.addf %89, %91 : vector<16x48xf32>
    %93 = arith.truncf %92 : vector<16x48xf32> to vector<16x48xbf16>
    %94 = arith.truncf %53 : vector<16x16xf32> to vector<16x16xbf16>
    %95 = arith.truncf %21 : vector<16x16xf32> to vector<16x16xbf16>
    %96 = arith.sitofp %43 : vector<16x1xi32> to vector<16x1xf32>
    %97 = arith.truncf %96 : vector<16x1xf32> to vector<16x1xbf16>
    %cst_50 = arith.constant 0.000000e+00 : bf16
    %98 = vector.broadcast %cst_50 : bf16 to vector<16x47xbf16>
    %99 = tpu.concatenate %93, %94, %95, %97, %98 in 1 : vector<16x48xbf16>, vector<16x16xbf16>, vector<16x16xbf16>, vector<16x1xbf16>, vector<16x47xbf16> -> vector<16x128xbf16>
    %c0_51 = arith.constant 0 : index
    %c0_52 = arith.constant 0 : index
    %100 = vector.load %arg17[%c0_51, %c0_52] : memref<16x128xbf16, #tpu.memory_space<vmem>>, vector<16x128xbf16>
    tpu.vector_store %arg17[%c0_51, %c0_52], %99 {strides = array<i32>} : memref<16x128xbf16, #tpu.memory_space<vmem>>, vector<16x128xbf16>,
    return
  }
  func.func @transform_0(%arg0: i32) -> (i32, i32) {
    %c0_i32 = arith.constant 0 : i32
    %c0_i32_0 = arith.constant 0 : i32
    return %arg0, %c0_i32 : i32, i32
  }
  func.func @transform_1(%arg0: i32) -> (i32, i32) {
    %c0_i32 = arith.constant 0 : i32
    %c0_i32_0 = arith.constant 0 : i32
    return %arg0, %c0_i32 : i32, i32
  }
  func.func @transform_2(%arg0: i32) -> (i32, i32) {
    %c0_i32 = arith.constant 0 : i32
    %c0_i32_0 = arith.constant 0 : i32
    %c0_i32_1 = arith.constant 0 : i32
    return %c0_i32, %c0_i32_0 : i32, i32
  }
  func.func @transform_3(%arg0: i32) -> (i32, i32) {
    %c0_i32 = arith.constant 0 : i32
    %c0_i32_0 = arith.constant 0 : i32
    %c0_i32_1 = arith.constant 0 : i32
    return %c0_i32, %c0_i32_0 : i32, i32
  }
  func.func @transform_4(%arg0: i32) -> (i32, i32) {
    %c0_i32 = arith.constant 0 : i32
    %c0_i32_0 = arith.constant 0 : i32
    %c0_i32_1 = arith.constant 0 : i32
    return %c0_i32, %c0_i32_0 : i32, i32
  }
  func.func @transform_5(%arg0: i32) -> (i32, i32) {
    %c0_i32 = arith.constant 0 : i32
    %c0_i32_0 = arith.constant 0 : i32
    %c0_i32_1 = arith.constant 0 : i32
    return %c0_i32, %c0_i32_0 : i32, i32
  }
  func.func @transform_6(%arg0: i32) -> (i32, i32) {
    %c0_i32 = arith.constant 0 : i32
    %c0_i32_0 = arith.constant 0 : i32
    %c0_i32_1 = arith.constant 0 : i32
    return %c0_i32, %c0_i32_0 : i32, i32
  }
  func.func @transform_7(%arg0: i32) -> (i32, i32) {
    %c0_i32 = arith.constant 0 : i32
    %c0_i32_0 = arith.constant 0 : i32
    %c0_i32_1 = arith.constant 0 : i32
    return %c0_i32, %c0_i32_0 : i32, i32
  }
  func.func @transform_8(%arg0: i32) -> (i32, i32) {
    %c0_i32 = arith.constant 0 : i32
    %c0_i32_0 = arith.constant 0 : i32
    %c0_i32_1 = arith.constant 0 : i32
    return %c0_i32, %c0_i32_0 : i32, i32
  }
  func.func @transform_9(%arg0: i32) -> (i32, i32) {
    %c0_i32 = arith.constant 0 : i32
    %c0_i32_0 = arith.constant 0 : i32
    %c0_i32_1 = arith.constant 0 : i32
    return %c0_i32, %c0_i32_0 : i32, i32
  }
  func.func @transform_10(%arg0: i32) -> (i32, i32) {
    %c0_i32 = arith.constant 0 : i32
    %c0_i32_0 = arith.constant 0 : i32
    %c0_i32_1 = arith.constant 0 : i32
    return %c0_i32, %c0_i32_0 : i32, i32
  }
  func.func @transform_11(%arg0: i32) -> (i32, i32) {
    %c0_i32 = arith.constant 0 : i32
    %c0_i32_0 = arith.constant 0 : i32
    %c0_i32_1 = arith.constant 0 : i32
    return %c0_i32, %c0_i32_0 : i32, i32
  }
  func.func @transform_12(%arg0: i32) -> (i32, i32) {
    %c0_i32 = arith.constant 0 : i32
    %c0_i32_0 = arith.constant 0 : i32
    %c0_i32_1 = arith.constant 0 : i32
    return %c0_i32, %c0_i32_0 : i32, i32
  }
  func.func @transform_13(%arg0: i32) -> (i32, i32) {
    %c0_i32 = arith.constant 0 : i32
    %c0_i32_0 = arith.constant 0 : i32
    %c0_i32_1 = arith.constant 0 : i32
    return %c0_i32, %c0_i32_0 : i32, i32
  }
  func.func @transform_14(%arg0: i32) -> (i32, i32) {
    %c0_i32 = arith.constant 0 : i32
    %c0_i32_0 = arith.constant 0 : i32
    %c0_i32_1 = arith.constant 0 : i32
    return %c0_i32, %c0_i32_0 : i32, i32
  }
  func.func @transform_15(%arg0: i32) -> (i32, i32) {
    %c0_i32 = arith.constant 0 : i32
    %c0_i32_0 = arith.constant 0 : i32
    %c0_i32_1 = arith.constant 0 : i32
    return %c0_i32, %c0_i32_0 : i32, i32
  }
  func.func @transform_16(%arg0: i32) -> (i32, i32) {
    %c0_i32 = arith.constant 0 : i32
    %c0_i32_0 = arith.constant 0 : i32
    return %arg0, %c0_i32 : i32, i32
  }
  func.func @transform_17(%arg0: i32) -> (i32, i32) {
    %c0_i32 = arith.constant 0 : i32
    %c0_i32_0 = arith.constant 0 : i32
    return %arg0, %c0_i32 : i32, i32
  }
}

</mosaic_0001>

<llo_original>
// kernel: tpu_custom_call.1
$region0: #{tpu_custom_call.1}
  #allocation0 [shape = 'u32[]', space=smem, size = 0x4, offset = 0x4, fixed_abs, tag = 'smem constant byte address 0x4 - core index']
  #allocation1 [shape = 'u32[72,128]{1,0:T(1,128)}', space=vmem, size = 0x9000, scoped, tag = 'internal scratch']
  %s0 = inlined_call_operand.hbm [shape: bf16[16,48], index: 0, kind: input, shape index: {}]
  %s1 = inlined_call_operand.vmem [shape: bf16[16,4], index: 1, kind: input, shape index: {}]
  %s2 = inlined_call_operand.vmem [shape: bf16[48,32], index: 2, kind: input, shape index: {}]
  %s3 = inlined_call_operand.vmem [shape: f32[1,32], index: 3, kind: input, shape index: {}]
  %s4 = inlined_call_operand.vmem [shape: bf16[32,32], index: 4, kind: input, shape index: {}]
  %s5 = inlined_call_operand.vmem [shape: f32[1,32], index: 5, kind: input, shape index: {}]
  %s6 = inlined_call_operand.vmem [shape: bf16[32,16], index: 6, kind: input, shape index: {}]
  %s7 = inlined_call_operand.vmem [shape: f32[1,16], index: 7, kind: input, shape index: {}]
  %s8 = inlined_call_operand.hbm [shape: bf16[16,32], index: 8, kind: input, shape index: {}]
  %s9 = inlined_call_operand.vmem [shape: f32[1,32], index: 9, kind: input, shape index: {}]
  %s10 = inlined_call_operand.vmem [shape: bf16[36,48], index: 10, kind: input, shape index: {}]
  %s11 = inlined_call_operand.vmem [shape: f32[1,32], index: 11, kind: input, shape index: {}]
  %s12 = inlined_call_operand.vmem [shape: bf16[32,32], index: 12, kind: input, shape index: {}]
  %s13 = inlined_call_operand.vmem [shape: f32[1,32], index: 13, kind: input, shape index: {}]
  %s14 = inlined_call_operand.hbm [shape: bf16[32,48], index: 14, kind: input, shape index: {}]
  %s15 = inlined_call_operand.vmem [shape: f32[1,48], index: 15, kind: input, shape index: {}]
  %s16 = inlined_call_operand.hbm [shape: bf16[16,128], index: 16, kind: output, shape index: {0}]
  %s17 = inlined_call_operand.hbm [shape: f32[8,128], index: 17, kind: output, shape index: {1}]
  %18 = xla_tuple %s16, %s17
  %s19 = sld [smem:[#allocation0]]
  $region94: #{tpu_custom_call.1} parent=0
    _
  %s21 = ssub.s32 1, %s19
  %s22 = scalar_select 0, %s21, %s19
  $region1: #{tpu_custom_call.1} parent=0
    #allocation2 [shape = 'u8[4096]{0}', space=vmem, size = 0x1000, scoped, tag = 'input window, operand 0, single buffered']
    #allocation3 [shape = 's32[1]{0}', space=sflag, size = 0x4, scoped, tag = 'scoped memory for tpu_custom_call.1']
    #allocation4 [shape = 's32[1]{0}', space=sflag, size = 0x4, scoped, tag = 'scoped memory for tpu_custom_call.1']
    #allocation5 [shape = 'u8[4096]{0}', space=vmem, size = 0x1000, scoped, tag = 'input window, operand 8, single buffered']
    #allocation6 [shape = 's32[1]{0}', space=sflag, size = 0x4, scoped, tag = 'scoped memory for tpu_custom_call.1']
    #allocation7 [shape = 'u8[8192]{0}', space=vmem, size = 0x2000, scoped, tag = 'input window, operand 14, single buffered']
    #allocation8 [shape = 'u8[4096]{0}', space=vmem, size = 0x1000, scoped, tag = 'output window, operand 0, single buffered']
    #allocation9 [shape = 'u8[4096]{0}', space=vmem, size = 0x1000, scoped, tag = 'output window, operand 1, single buffered']
    #allocation10 [shape = 's32[1]{0}', space=sflag, size = 0x4, scoped, tag = 'scoped memory for tpu_custom_call.1']
    %23 = vsyncpa [#allocation3], 0
    %24 = vsyncpa [#allocation6], 0
    %25 = vsyncpa [#allocation4], 0
    %26 = vsyncpa [#allocation10], 0
    // Predicated region
    $region2: #{tpu_custom_call.1} parent=1 // pred_check
      _
    $region3: #{tpu_custom_call.1} parent=1 // pred_check_branch
      %28 = sbr.rel (0) target = $region5
    $region4: #{tpu_custom_call.1} parent=1 // pred_region
      %30 = vsyncadd [#allocation3], 0
      %s31 = sshll.u32 %s0, 4
      %s32 = int_to_ptr.hbm [resolvable:$true] %s31
      %s33 = sshll.u32 [#allocation2], 4
      %s34 = int_to_ptr.vmem [resolvable:$true] %s33
      %39 = dma.hbm_to_vmem [thread:$0]  %s32, 128, %s34, [#allocation3], 64, 64, 4
    $region5: #{tpu_custom_call.1} parent=1 // pred_fallthru
      _
    // Predicated region
    $region6: #{tpu_custom_call.1} parent=1 // pred_check
      _
    $region7: #{tpu_custom_call.1} parent=1 // pred_check_branch
      %41 = sbr.rel (0) target = $region9
    $region8: #{tpu_custom_call.1} parent=1 // pred_region
      _
    $region9: #{tpu_custom_call.1} parent=1 // pred_fallthru
      _
    // Predicated region
    $region10: #{tpu_custom_call.1} parent=1 // pred_check
      _
    $region11: #{tpu_custom_call.1} parent=1 // pred_check_branch
      %43 = sbr.rel (0) target = $region13
    $region12: #{tpu_custom_call.1} parent=1 // pred_region
      _
    $region13: #{tpu_custom_call.1} parent=1 // pred_fallthru
      _
    // Predicated region
    $region14: #{tpu_custom_call.1} parent=1 // pred_check
      _
    $region15: #{tpu_custom_call.1} parent=1 // pred_check_branch
      %45 = sbr.rel (0) target = $region17
    $region16: #{tpu_custom_call.1} parent=1 // pred_region
      _
    $region17: #{tpu_custom_call.1} parent=1 // pred_fallthru
      _
    // Predicated region
    $region18: #{tpu_custom_call.1} parent=1 // pred_check
      _
    $region19: #{tpu_custom_call.1} parent=1 // pred_check_branch
      %47 = sbr.rel (0) target = $region21
    $region20: #{tpu_custom_call.1} parent=1 // pred_region
      _
    $region21: #{tpu_custom_call.1} parent=1 // pred_fallthru
      _
    // Predicated region
    $region22: #{tpu_custom_call.1} parent=1 // pred_check
      _
    $region23: #{tpu_custom_call.1} parent=1 // pred_check_branch
      %49 = sbr.rel (0) target = $region25
    $region24: #{tpu_custom_call.1} parent=1 // pred_region
      _
    $region25: #{tpu_custom_call.1} parent=1 // pred_fallthru
      _
    // Predicated region
    $region26: #{tpu_custom_call.1} parent=1 // pred_check
      _
    $region27: #{tpu_custom_call.1} parent=1 // pred_check_branch
      %51 = sbr.rel (0) target = $region29
    $region28: #{tpu_custom_call.1} parent=1 // pred_region
      _
    $region29: #{tpu_custom_call.1} parent=1 // pred_fallthru
      _
    // Predicated region
    $region30: #{tpu_custom_call.1} parent=1 // pred_check
      _
    $region31: #{tpu_custom_call.1} parent=1 // pred_check_branch
      %53 = sbr.rel (0) target = $region33
    $region32: #{tpu_custom_call.1} parent=1 // pred_region
      _
    $region33: #{tpu_custom_call.1} parent=1 // pred_fallthru
      _
    // Predicated region
    $region34: #{tpu_custom_call.1} parent=1 // pred_check
      _
    $region35: #{tpu_custom_call.1} parent=1 // pred_check_branch
      %55 = sbr.rel (0) target = $region37
    $region36: #{tpu_custom_call.1} parent=1 // pred_region
      %57 = vsyncadd [#allocation6], 0
      %s58 = sshll.u32 %s8, 4
      %s59 = int_to_ptr.hbm [resolvable:$true] %s58
      %s60 = sshll.u32 [#allocation5], 4
      %s61 = int_to_ptr.vmem [resolvable:$true] %s60
      %66 = dma.hbm_to_vmem [thread:$0]  %s59, 128, %s61, [#allocation6], 64, 64, 4
    $region37: #{tpu_custom_call.1} parent=1 // pred_fallthru
      _
    // Predicated region
    $region38: #{tpu_custom_call.1} parent=1 // pred_check
      _
    $region39: #{tpu_custom_call.1} parent=1 // pred_check_branch
      %68 = sbr.rel (0) target = $region41
    $region40: #{tpu_custom_call.1} parent=1 // pred_region
      _
    $region41: #{tpu_custom_call.1} parent=1 // pred_fallthru
      _
    // Predicated region
    $region42: #{tpu_custom_call.1} parent=1 // pred_check
      _
    $region43: #{tpu_custom_call.1} parent=1 // pred_check_branch
      %70 = sbr.rel (0) target = $region45
    $region44: #{tpu_custom_call.1} parent=1 // pred_region
      _
    $region45: #{tpu_custom_call.1} parent=1 // pred_fallthru
      _
    // Predicated region
    $region46: #{tpu_custom_call.1} parent=1 // pred_check
      _
    $region47: #{tpu_custom_call.1} parent=1 // pred_check_branch
      %72 = sbr.rel (0) target = $region49
    $region48: #{tpu_custom_call.1} parent=1 // pred_region
      _
    $region49: #{tpu_custom_call.1} parent=1 // pred_fallthru
      _
    // Predicated region
    $region50: #{tpu_custom_call.1} parent=1 // pred_check
      _
    $region51: #{tpu_custom_call.1} parent=1 // pred_check_branch
      %74 = sbr.rel (0) target = $region53
    $region52: #{tpu_custom_call.1} parent=1 // pred_region
      _
    $region53: #{tpu_custom_call.1} parent=1 // pred_fallthru
      _
    // Predicated region
    $region54: #{tpu_custom_call.1} parent=1 // pred_check
      _
    $region55: #{tpu_custom_call.1} parent=1 // pred_check_branch
      %76 = sbr.rel (0) target = $region57
    $region56: #{tpu_custom_call.1} parent=1 // pred_region
      _
    $region57: #{tpu_custom_call.1} parent=1 // pred_fallthru
      _
    // Predicated region
    $region58: #{tpu_custom_call.1} parent=1 // pred_check
      _
    $region59: #{tpu_custom_call.1} parent=1 // pred_check_branch
      %78 = sbr.rel (0) target = $region61
    $region60: #{tpu_custom_call.1} parent=1 // pred_region
      %80 = vsyncadd [#allocation6], 0
      %s81 = sshll.u32 %s14, 4
      %s82 = int_to_ptr.hbm [resolvable:$true] %s81
      %s83 = sshll.u32 [#allocation7], 4
      %s84 = int_to_ptr.vmem [resolvable:$true] %s83
      %89 = dma.hbm_to_vmem [thread:$0]  %s82, 256, %s84, [#allocation6], 64, 64, 4
    $region61: #{tpu_custom_call.1} parent=1 // pred_fallthru
      _
    // Predicated region
    $region62: #{tpu_custom_call.1} parent=1 // pred_check
      _
    $region63: #{tpu_custom_call.1} parent=1 // pred_check_branch
      %91 = sbr.rel (0) target = $region65
    $region64: #{tpu_custom_call.1} parent=1 // pred_region
      _
    $region65: #{tpu_custom_call.1} parent=1 // pred_fallthru
      _
    // Predicated region
    $region66: #{tpu_custom_call.1} parent=1 // pred_check
      _
    $region67: #{tpu_custom_call.1} parent=1 // pred_check_branch
      %93 = sbr.rel (0) target = $region69
    $region68: #{tpu_custom_call.1} parent=1 // pred_region
      %95 = dma.done [#allocation3], 128
    $region69: #{tpu_custom_call.1} parent=1 // pred_fallthru
      _
    // Predicated region
    $region70: #{tpu_custom_call.1} parent=1 // pred_check
      _
    $region71: #{tpu_custom_call.1} parent=1 // pred_check_branch
      %97 = sbr.rel (0) target = $region73
    $region72: #{tpu_custom_call.1} parent=1 // pred_region
      %99 = dma.done [#allocation6], 128
    $region73: #{tpu_custom_call.1} parent=1 // pred_fallthru
      _
    // Predicated region
    $region74: #{tpu_custom_call.1} parent=1 // pred_check
      _
    $region75: #{tpu_custom_call.1} parent=1 // pred_check_branch
      %101 = sbr.rel (0) target = $region77
    $region76: #{tpu_custom_call.1} parent=1 // pred_region
      %103 = dma.done [#allocation6], 256
    $region77: #{tpu_custom_call.1} parent=1 // pred_fallthru
      _
    %v105 = vld [vmem:[#allocation2] sm:$0xf]
    %v106 = vld [vmem:[#allocation2 + $0x4] sm:$0xf]
    %v107 = vld [vmem:[%s2] sm:$0xf]
    %v108 = vld [vmem:[%s2 + $0x4] sm:$0xf]
    %v109 = vld [vmem:[%s2 + $0x8] sm:$0xf]
    %v110 = vld [vmem:[%s2 + $0xc] sm:$0xf]
    %v111 = vld [vmem:[%s2 + $0x10] sm:$0xf]
    %v112 = vld [vmem:[%s2 + $0x14] sm:$0xf]
    %v113 = vld [vmem:[%s3] sm:$0x1]
    %v115 = vperm.slane %v113, 0
    %v119 = vunpack.c.l.b16 %v105
    %v120 = vunpack.c.l.b16 %v106
    %v121 = vpack.c.b16 %v120, %v119
    %v128 = vunpack.c.l.b16 %v107
    %v129 = vunpack.c.l.b16 %v108
    %v130 = vunpack.c.l.b16 %v109
    %v131 = vunpack.c.l.b16 %v110
    %v132 = vunpack.c.l.b16 %v111
    %v133 = vunpack.c.l.b16 %v112
    %v134 = vpack.c.b16 %v129, %v128
    %v135 = vpack.c.b16 %v131, %v130
    %v136 = vpack.c.b16 %v133, %v132
    %vm140 = vcmask 392192
    %v142 = vsel %vm140, %v121, 0
    %144 = vmatpush.bf16.msra.mxu0 0
    %145 = vmatpush.bf16.msra.mxu0 0
    %146 = vmatpush.bf16.msra.mxu0 0
    %147 = vmatpush.bf16.msra.mxu0 0
    %148 = vmatpush.bf16.msra.mxu0 0
    %149 = vmatpush.bf16.msra.mxu0 %v136
    %150 = vmatpush.bf16.msra.mxu0 %v135
    %151 = vmatpush.bf16.msra.mxu0 %v134
    %152 = vmatmul.bf16.gmra.mxu0 %v142
    %v153 = vpop.f32.mrf.mxu0
    %v154 = vadd.f32 %v115, %v153
    %v155 = vpop.f32.mrf.mxu0
    %v156 = vadd.f32 %v115, %v155
    %157 = vdwg.mxu0
    %v158 = vmax.f32 %v154, 0.0
    %v159 = vmax.f32 %v156, 0.0
    %v160 = vpack.c.bf16 %v159, %v158
    %v161 = vld [vmem:[%s4] sm:$0xf]
    %v162 = vld [vmem:[%s4 + $0x4] sm:$0xf]
    %v163 = vld [vmem:[%s4 + $0x8] sm:$0xf]
    %v164 = vld [vmem:[%s4 + $0xc] sm:$0xf]
    %v165 = vld [vmem:[%s5] sm:$0x1]
    %v167 = vperm.slane %v165, 0
    %v173 = vunpack.c.l.b16 %v161
    %v174 = vunpack.c.l.b16 %v162
    %v175 = vunpack.c.l.b16 %v163
    %v176 = vunpack.c.l.b16 %v164
    %v177 = vpack.c.b16 %v174, %v173
    %v178 = vpack.c.b16 %v176, %v175
    %vm181 = vcmask 261120
    %v183 = vsel %vm181, %v160, 0
    %185 = vmatpush.bf16.msra.mxu0 0
    %186 = vmatpush.bf16.msra.mxu0 0
    %187 = vmatpush.bf16.msra.mxu0 0
    %188 = vmatpush.bf16.msra.mxu0 0
    %189 = vmatpush.bf16.msra.mxu0 0
    %190 = vmatpush.bf16.msra.mxu0 0
    %191 = vmatpush.bf16.msra.mxu0 %v178
    %192 = vmatpush.bf16.msra.mxu0 %v177
    %193 = vmatmul.bf16.gmra.mxu0 %v183
    %v194 = vpop.f32.mrf.mxu0
    %v195 = vadd.f32 %v167, %v194
    %v196 = vpop.f32.mrf.mxu0
    %v197 = vadd.f32 %v167, %v196
    %198 = vdwg.mxu0
    %v199 = vmax.f32 %v195, 0.0
    %v200 = vmax.f32 %v197, 0.0
    %v201 = vpack.c.bf16 %v200, %v199
    %v202 = vld [vmem:[%s6] sm:$0xf]
    %v203 = vld [vmem:[%s6 + $0x4] sm:$0xf]
    %v204 = vld [vmem:[%s6 + $0x8] sm:$0xf]
    %v205 = vld [vmem:[%s6 + $0xc] sm:$0xf]
    %v206 = vld [vmem:[%s7] sm:$0x1]
    %v208 = vperm.slane %v206, 0
    %v214 = vunpack.c.l.b16 %v202
    %v215 = vunpack.c.l.b16 %v203
    %v216 = vunpack.c.l.b16 %v204
    %v217 = vunpack.c.l.b16 %v205
    %v218 = vpack.c.b16 %v215, %v214
    %v219 = vpack.c.b16 %v217, %v216
    %v223 = vsel %vm181, %v201, 0
    %225 = vmatpush.bf16.msra.mxu0 0
    %226 = vmatpush.bf16.msra.mxu0 0
    %227 = vmatpush.bf16.msra.mxu0 0
    %228 = vmatpush.bf16.msra.mxu0 0
    %229 = vmatpush.bf16.msra.mxu0 0
    %230 = vmatpush.bf16.msra.mxu0 0
    %231 = vmatpush.bf16.msra.mxu0 %v219
    %232 = vmatpush.bf16.msra.mxu0 %v218
    %233 = vmatmul.bf16.gmra.mxu0 %v223
    %v234 = vpop.f32.mrf.mxu0
    %v235 = vadd.f32 %v208, %v234
    %v236 = vpop.f32.mrf.mxu0
    %v237 = vadd.f32 %v208, %v236
    %238 = vdwg.mxu0
    %v239 = vmul.f32 %v235, %v235
    %v240 = vmul.f32 %v237, %v237
    %vm241 = vcmask 130048
    %v242 = vsel %vm241, %v239, 0.0
    %243 = vadd.xlane.f32.xlu0 %v242
    %v244 = vpop.xlane.xlu0 %243
    %v245 = vsel %vm241, %v240, 0.0
    %246 = vadd.xlane.f32.xlu0 %v245
    %v247 = vpop.xlane.xlu0 %246
    %v248 = vpack.c.bf16 %v235, %v235
    %v249 = vpack.c.bf16 %v237, %v237
    %v250 = vld [vmem:[#allocation5] sm:$0xf]
    %v251 = vld [vmem:[#allocation5 + $0x4] sm:$0xf]
    %v254 = vunpack.c.l.b16 %v248
    %v255 = vunpack.c.l.b16 %v249
    %v256 = vpack.c.b16 %v255, %v254
    %v259 = vunpack.c.l.b16 %v250
    %v260 = vunpack.c.l.b16 %v251
    %v261 = vpack.c.b16 %v260, %v259
    %v264 = vsel %vm241, %v256, 0
    %266 = vmatpush.bf16.msra.mxu0 0
    %267 = vmatpush.bf16.msra.mxu0 0
    %268 = vmatpush.bf16.msra.mxu0 0
    %269 = vmatpush.bf16.msra.mxu0 0
    %270 = vmatpush.bf16.msra.mxu0 0
    %271 = vmatpush.bf16.msra.mxu0 0
    %272 = vmatpush.bf16.msra.mxu0 0
    %273 = vmatpush.bf16.msra.mxu0 %v261
    %274 = vmatmul.bf16.gmra.mxu0 %v264
    %v275 = vpop.f32.mrf.mxu0
    %v276 = vadd.f32 0.0, %v275
    %v277 = vpop.f32.mrf.mxu0
    %v278 = vadd.f32 0.0, %v277
    %279 = vdwg.mxu0
    %v280 = vmul.f32 %v276, 2.0
    %v281 = vmul.f32 %v278, 2.0
    %v282 = vsub.f32 %v244, %v280
    %v283 = vsub.f32 %v247, %v281
    %v284 = vld [vmem:[%s9] sm:$0x1]
    %v286 = vperm.slane %v284, 0
    %v288 = vadd.f32 %v282, %v286
    %v289 = vadd.f32 %v283, %v286
    %v290 = vlaneseq
    %v291 = vand.u32 %v290, 127
    %v292 = vsel %vm181, %v288, inf
    %293 = vmin.xlane.f32.xlu0 %v292
    %v294 = vpop.xlane.xlu0 %293
    %v295 = vsel %vm181, %v289, inf
    %296 = vmin.xlane.f32.xlu0 %v295
    %v297 = vpop.xlane.xlu0 %296
    %vm298 = vcmp.le.f32.partialorder %v288, %v294
    %vm299 = vcmp.le.f32.partialorder %v289, %v297
    %v300 = vsel %vm298, %v291, 32
    %v301 = vsel %vm299, %v291, 32
    %v302 = vsel %vm181, %v300, 2147483647
    %v303 = vand.u32 %v302, 65535
    %v304 = vshra.s32 %v302, 16
    %v305 = vcvt.s32.f32 %v303
    %v306 = vcvt.s32.f32 %v304
    %307 = vmin.xlane.f32.xlu0 %v306
    %v308 = vpop.xlane.xlu0 %307
    %vm309 = vcmp.eq.f32.partialorder %v306, %v308
    %v310 = vsel %vm309, %v305, inf
    %311 = vmin.xlane.f32.xlu0 %v310
    %v312 = vpop.xlane.xlu0 %311
    %v313 = vcvt.f32.s32 %v312
    %v314 = vcvt.f32.s32 %v308
    %v315 = vshll.u32 %v314, 16
    %v316 = vadd.s32 %v315, %v313
    %v317 = vsel %vm181, %v301, 2147483647
    %v318 = vand.u32 %v317, 65535
    %v319 = vshra.s32 %v317, 16
    %v320 = vcvt.s32.f32 %v318
    %v321 = vcvt.s32.f32 %v319
    %322 = vmin.xlane.f32.xlu0 %v321
    %v323 = vpop.xlane.xlu0 %322
    %vm324 = vcmp.eq.f32.partialorder %v321, %v323
    %v325 = vsel %vm324, %v320, inf
    %326 = vmin.xlane.f32.xlu0 %v325
    %v327 = vpop.xlane.xlu0 %326
    %v328 = vcvt.f32.s32 %v327
    %v329 = vcvt.f32.s32 %v323
    %v330 = vshll.u32 %v329, 16
    %v331 = vadd.s32 %v330, %v328
    %vm332 = vcmp.eq.s32.totalorder %v291, %v316
    %vm333 = vcmp.eq.s32.totalorder %v291, %v331
    %v334 = vsel %vm332, 1, 0
    %v335 = vsel %vm333, 1, 0
    %v336 = vcvt.s32.f32 %v334
    %v337 = vcvt.s32.f32 %v335
    %v338 = vpack.c.bf16 %v336, %v336
    %v339 = vpack.c.bf16 %v337, %v337
    %v340 = vld [vmem:[%s1] sm:$0xf]
    %v341 = vld [vmem:[%s1 + $0x4] sm:$0xf]
    %v344 = vunpack.c.l.b16 %v338
    %v345 = vunpack.c.l.b16 %v339
    %v346 = vpack.c.b16 %v345, %v344
    %v349 = vunpack.c.l.b16 %v340
    %v350 = vunpack.c.l.b16 %v341
    %v351 = vpack.c.b16 %v350, %v349
    %352 = vrot.lane.b32.xlu0 %v351, 32
    %v353 = vpop.permute.xlu0 %352
    %v356 = vsel %vm181, %v346, %v353
    %v357 = vld [vmem:[%s10] sm:$0xf]
    %v358 = vld [vmem:[%s10 + $0x4] sm:$0xf]
    %v359 = vld [vmem:[%s10 + $0x8] sm:$0xf]
    %v360 = vld [vmem:[%s10 + $0xc] sm:$0xf]
    %v361 = vld [vmem:[%s10 + $0x10] sm:$0x3]
    %v367 = vunpack.c.l.b16 %v357
    %v368 = vunpack.c.l.b16 %v358
    %v369 = vunpack.c.l.b16 %v359
    %v370 = vunpack.c.l.b16 %v360
    %v371 = vunpack.c.l.b16 %v361
    %v372 = vpack.c.b16 %v368, %v367
    %v373 = vpack.c.b16 %v370, %v369
    %v374 = vpack.c.b16 %v371, %v371
    %vm377 = vcmask 293888
    %v378 = vsel %vm377, %v356, 0
    %vm380 = vcmask 1041408
    %v382 = vsel %vm380, %v374, 0
    %384 = vmatpush.bf16.msra.mxu0 0
    %385 = vmatpush.bf16.msra.mxu0 0
    %386 = vmatpush.bf16.msra.mxu0 0
    %387 = vmatpush.bf16.msra.mxu0 0
    %388 = vmatpush.bf16.msra.mxu0 0
    %389 = vmatpush.bf16.msra.mxu0 %v382
    %390 = vmatpush.bf16.msra.mxu0 %v373
    %391 = vmatpush.bf16.msra.mxu0 %v372
    %392 = vmatmul.bf16.gmra.mxu0 %v378
    %v393 = vpop.f32.mrf.mxu0
    %v394 = vadd.f32 0.0, %v393
    %v395 = vpop.f32.mrf.mxu0
    %v396 = vadd.f32 0.0, %v395
    %397 = vdwg.mxu0
    %v398 = vld [vmem:[%s11] sm:$0x1]
    %v400 = vperm.slane %v398, 0
    %401 = vrot.lane.b32.xlu0 %v400, 16
    %v402 = vpop.permute.xlu0 %401
    %v404 = vadd.f32 %v394, %v402
    %v405 = vadd.f32 %v396, %v402
    %v406 = vmax.f32 %v404, 0.0
    %v407 = vmax.f32 %v405, 0.0
    %s408 = smul.u32 0, 16
    %v409 = vlaneseq
    %v410 = vshrl.u32 %v409, 7
    %v411 = vadd.s32 %v410, 8
    %v412 = vstv %s408
    %v413 = vadd.s32 %v412, %v410
    %v414 = vadd.s32 %v412, %v411
    %vm415 = vcmp.lt.s32.totalorder %v413, 16
    %vm416 = vcmp.lt.s32.totalorder %v414, 16
    %v417 = vsel %vm415, 1, 0
    %v418 = vsel %vm416, 1, 0
    %v419 = vcvt.s32.f32 %v417
    %v420 = vcvt.s32.f32 %v418
    %v421 = vsub.f32 %v394, %v235
    %v422 = vsub.f32 %v396, %v237
    %v423 = vmul.f32 %v421, %v421
    %v424 = vmul.f32 %v422, %v422
    %v425 = vmul.f32 %v423, %v419
    %v426 = vmul.f32 %v424, %v420
    %v427 = vsel %vm241, %v425, 0.0
    %428 = vadd.xlane.f32.xlu0 %v427
    %v429 = vpop.xlane.xlu0 %428
    %v430 = vsel %vm241, %v426, 0.0
    %431 = vadd.xlane.f32.xlu0 %v430
    %v432 = vpop.xlane.xlu0 %431
    %v433 = vadd.f32 %v429, %v432
    %v434 = vrot.slane %v433, 4
    %v435 = vadd.f32 %v433, %v434
    %v436 = vrot.slane %v435, 2
    %v437 = vadd.f32 %v435, %v436
    %v438 = vrot.slane %v437, 1
    %v439 = vadd.f32 %v437, %v438
    %440 = vst [vmem:[#allocation9] sm:$0xff] %v439
    %v441 = vpack.c.bf16 %v407, %v406
    %v442 = vld [vmem:[%s12] sm:$0xf]
    %v443 = vld [vmem:[%s12 + $0x4] sm:$0xf]
    %v444 = vld [vmem:[%s12 + $0x8] sm:$0xf]
    %v445 = vld [vmem:[%s12 + $0xc] sm:$0xf]
    %v446 = vld [vmem:[%s13] sm:$0x1]
    %v448 = vperm.slane %v446, 0
    %451 = vrot.lane.b32.xlu0 %v441, 112
    %v452 = vpop.permute.xlu0 %451
    %v457 = vunpack.c.l.b16 %v442
    %v458 = vunpack.c.l.b16 %v443
    %v459 = vunpack.c.l.b16 %v444
    %v460 = vunpack.c.l.b16 %v445
    %v461 = vpack.c.b16 %v458, %v457
    %v462 = vpack.c.b16 %v460, %v459
    %v466 = vsel %vm181, %v452, 0
    %468 = vmatpush.bf16.msra.mxu0 0
    %469 = vmatpush.bf16.msra.mxu0 0
    %470 = vmatpush.bf16.msra.mxu0 0
    %471 = vmatpush.bf16.msra.mxu0 0
    %472 = vmatpush.bf16.msra.mxu0 0
    %473 = vmatpush.bf16.msra.mxu0 0
    %474 = vmatpush.bf16.msra.mxu0 %v462
    %475 = vmatpush.bf16.msra.mxu0 %v461
    %476 = vmatmul.bf16.gmra.mxu0 %v466
    %v477 = vpop.f32.mrf.mxu0
    %v478 = vadd.f32 %v448, %v477
    %v479 = vpop.f32.mrf.mxu0
    %v480 = vadd.f32 %v448, %v479
    %481 = vdwg.mxu0
    %v482 = vmax.f32 %v478, 0.0
    %v483 = vmax.f32 %v480, 0.0
    %v484 = vpack.c.bf16 %v483, %v482
    %v485 = vld [vmem:[#allocation7] sm:$0xf]
    %v486 = vld [vmem:[#allocation7 + $0x4] sm:$0xf]
    %v487 = vld [vmem:[#allocation7 + $0x8] sm:$0xf]
    %v488 = vld [vmem:[#allocation7 + $0xc] sm:$0xf]
    %v489 = vld [vmem:[%s15] sm:$0x1]
    %v491 = vperm.slane %v489, 0
    %v497 = vunpack.c.l.b16 %v485
    %v498 = vunpack.c.l.b16 %v486
    %v499 = vunpack.c.l.b16 %v487
    %v500 = vunpack.c.l.b16 %v488
    %v501 = vpack.c.b16 %v498, %v497
    %v502 = vpack.c.b16 %v500, %v499
    %v506 = vsel %vm181, %v484, 0
    %508 = vmatpush.bf16.msra.mxu0 0
    %509 = vmatpush.bf16.msra.mxu0 0
    %510 = vmatpush.bf16.msra.mxu0 0
    %511 = vmatpush.bf16.msra.mxu0 0
    %512 = vmatpush.bf16.msra.mxu0 0
    %513 = vmatpush.bf16.msra.mxu0 0
    %514 = vmatpush.bf16.msra.mxu0 %v502
    %515 = vmatpush.bf16.msra.mxu0 %v501
    %516 = vmatmul.bf16.gmra.mxu0 %v506
    %v517 = vpop.f32.mrf.mxu0
    %v518 = vadd.f32 %v491, %v517
    %v519 = vpop.f32.mrf.mxu0
    %v520 = vadd.f32 %v491, %v519
    %521 = vdwg.mxu0
    %v522 = vpack.c.bf16 %v518, %v518
    %v523 = vpack.c.bf16 %v520, %v520
    %v524 = vpack.c.bf16 %v394, %v394
    %v525 = vpack.c.bf16 %v396, %v396
    %v526 = vcvt.s32.f32 %v316
    %v527 = vcvt.s32.f32 %v331
    %v528 = vpack.c.bf16 %v526, %v526
    %v529 = vpack.c.bf16 %v527, %v527
    %v532 = vunpack.c.l.b16 %v522
    %v533 = vunpack.c.l.b16 %v523
    %v534 = vpack.c.b16 %v533, %v532
    %v537 = vunpack.c.l.b16 %v524
    %v538 = vunpack.c.l.b16 %v525
    %v539 = vpack.c.b16 %v538, %v537
    %540 = vrot.lane.b32.xlu0 %v539, 48
    %v541 = vpop.permute.xlu0 %540
    %542 = vrot.lane.b32.xlu0 %v256, 64
    %v543 = vpop.permute.xlu0 %542
    %v546 = vunpack.c.l.b16 %v528
    %v547 = vunpack.c.l.b16 %v529
    %v548 = vpack.c.b16 %v547, %v546
    %v551 = vsel %vm140, %v534, %v541
    %vm552 = vcmask 523264
    %v554 = vsel %vm552, %v551, %v543
    %vm555 = vcmask 654336
    %v557 = vsel %vm555, %v554, %v548
    %vm558 = vcmask 662528
    %v560 = vsel %vm558, %v557, 0
    %v562 = vunpack.c.l.b16 %v560
    %v563 = vunpack.c.h.b16 %v560
    %v564 = vpack.c.b16 %v562, %v562
    %v565 = vpack.c.b16 %v563, %v563
    %568 = vst [vmem:[#allocation8] sm:$0xf] %v564
    %569 = vst [vmem:[#allocation8 + $0x4] sm:$0xf] %v565
    // Predicated region
    $region78: #{tpu_custom_call.1} parent=1 // pred_check
      _
    $region79: #{tpu_custom_call.1} parent=1 // pred_check_branch
      %571 = sbr.rel (0) target = $region81
    $region80: #{tpu_custom_call.1} parent=1 // pred_region
      %573 = vsyncadd [#allocation4], 0
      %s574 = sshll.u32 [#allocation8], 4
      %s575 = int_to_ptr.vmem [resolvable:$true] %s574
      %s576 = sshll.u32 %s16, 4
      %s577 = int_to_ptr.hbm [resolvable:$true] %s576
      %582 = dma.vmem_to_hbm [thread:$0]  %s575, 128, %s577, [#allocation4], 64, 64, 4
    $region81: #{tpu_custom_call.1} parent=1 // pred_fallthru
      _
    // Predicated region
    $region82: #{tpu_custom_call.1} parent=1 // pred_check
      _
    $region83: #{tpu_custom_call.1} parent=1 // pred_check_branch
      %584 = sbr.rel (0) target = $region85
    $region84: #{tpu_custom_call.1} parent=1 // pred_region
      %586 = vsyncadd [#allocation10], 0
      %s588 = sshll.u32 [#allocation9], 4
      %s589 = int_to_ptr.vmem [resolvable:$true] %s588
      %s590 = sshll.u32 %s17, 4
      %s591 = int_to_ptr.hbm [resolvable:$true] %s590
      %593 = dma.vmem_to_hbm [thread:$0]  %s589, 128, %s591, [#allocation10]
    $region85: #{tpu_custom_call.1} parent=1 // pred_fallthru
      _
    // Predicated region
    $region86: #{tpu_custom_call.1} parent=1 // pred_check
      _
    $region87: #{tpu_custom_call.1} parent=1 // pred_check_branch
      %595 = sbr.rel (0) target = $region89
    $region88: #{tpu_custom_call.1} parent=1 // pred_region
      %597 = dma.done [#allocation4], 128
    $region89: #{tpu_custom_call.1} parent=1 // pred_fallthru
      _
    // Predicated region
    $region90: #{tpu_custom_call.1} parent=1 // pred_check
      _
    $region91: #{tpu_custom_call.1} parent=1 // pred_check_branch
      %599 = sbr.rel (0) target = $region93
    $region92: #{tpu_custom_call.1} parent=1 // pred_region
      %601 = dma.done [#allocation10], 128
    $region93: #{tpu_custom_call.1} parent=1 // pred_fallthru
      _
    %602 = vsyncpa [#allocation3], 1
    %603 = vsyncpa [#allocation6], 1
    %604 = vsyncpa [#allocation4], 1
    %605 = vsyncpa [#allocation10], 1

</llo_original>
